<compile_context>
chip_gen: v7x
topology: tpu7x:2x2x1
jax: 0.10.0
libtpu: 0.0.40
codegen_flags: <defaults>
</compile_context>

<pallas_src>
import functools
import math

import jax
import jax.numpy as jnp
from jax.experimental import pallas as pl
from jax.experimental.pallas import tpu as pltpu


def _round_up(a, b):
    return ((a + b - 1) // b) * b


def projection_kernel(x_ref, w_ref, b_ref, o_ref, m_ref, l_ref, *, num_sub):
    """One (row-tile, sweep, vocab-tile) grid step.  Grid = (num_n, 2, num_v).

    x_ref: (tn, D)   activation tile, resident across the sweep and vocab axes
    w_ref: (D, tv)   streamed weight tile (pre-transposed -> MXU contracts sublane dim)
    b_ref: (1, tv)   streamed bias tile (f32)
    o_ref: (tn, tv)  output block (written only in sweep 1)
    m_ref, l_ref: (tn, 1) f32 scratch -- running max / running sum(exp).
                  After sweep 0 finishes, m_ref holds the full lse = m + log(l).
    """
    s = pl.program_id(1)          # sweep index: 0 = online LSE pass, 1 = write pass
    j = pl.program_id(2)          # vocab-tile index
    num_v = pl.num_programs(2)
    tv = w_ref.shape[1]
    sub = tv // num_sub

    @pl.when(jnp.logical_and(s == 0, j == 0))
    def _():
        m_ref[...] = jnp.full_like(m_ref, -jnp.inf)
        l_ref[...] = jnp.zeros_like(l_ref)

    @pl.when(s == 0)
    def _():
        x = x_ref[...]
        # Statically unrolled sub-chunks: the MXU matmul of chunk c+1 is independent of the
        # EUP/XLU epilogue (exp, cross-lane max/sum) of chunk c, so the scheduler overlaps them.
        for c in range(num_sub):
            logits = jnp.dot(x, w_ref[:, c * sub:(c + 1) * sub],
                             preferred_element_type=jnp.float32)
            logits = logits + b_ref[:, c * sub:(c + 1) * sub]
            m_prev = m_ref[...]
            m_new = jnp.maximum(m_prev, jnp.max(logits, axis=-1, keepdims=True))
            l_ref[...] = l_ref[...] * jnp.exp(m_prev - m_new) + jnp.sum(
                jnp.exp(logits - m_new), axis=-1, keepdims=True)
            m_ref[...] = m_new

    @pl.when(jnp.logical_and(s == 0, j == num_v - 1))
    def _():
        # Fold the running sum into the running max: m_ref now holds the log-sum-exp.
        m_ref[...] = m_ref[...] + jnp.log(l_ref[...])

    @pl.when(s == 1)
    def _():
        logits = jnp.dot(x_ref[...], w_ref[...],
                         preferred_element_type=jnp.float32) + b_ref[...]
        o_ref[...] = (logits - m_ref[...]).astype(o_ref.dtype)


def projection_layer(x, weight, bias, *, tile_n=512, tile_v=512,
                     compute_dtype=jnp.bfloat16, out_dtype=jnp.float32):
    """x: (B, S, D); weight: (V, D) (PyTorch nn.Linear layout); bias: (V,).

    Returns log_softmax(x @ weight.T + bias, axis=-1), shape (B, S, V), out_dtype.
    compute_dtype: dtype fed to the MXU (bf16 by default); accumulation and the
    log-softmax epilogue are always f32.
    """
    B, S, D = x.shape
    V = weight.shape[0]
    N = B * S
    compute_dtype = jnp.dtype(compute_dtype)
    itemsize = compute_dtype.itemsize

    # ---- tile choices ------------------------------------------------------
    # Vocab: pad to a lane multiple, then pick the largest tile (multiple of 128, <= tile_v)
    # that divides the padded width -> no extra vocab padding beyond lane alignment.
    Vp = _round_up(V, 128)
    tv = 128
    cand = 256
    while cand <= min(tile_v, Vp):
        if Vp % cand == 0:
            tv = cand
        cand += 128
    num_v = Vp // tv

    # Rows: bf16 packs 16 rows per sublane tile, f32 packs 8.
    sub_rows = 16 if itemsize == 2 else 8
    tn = max(sub_rows, min(_round_up(tile_n, sub_rows), _round_up(N, sub_rows)))

    # ---- generation-aware VMEM budget ---------------------------------------
    try:
        vmem_cap = int(pltpu.get_tpu_info().vmem_capacity_bytes)
    except Exception:
        vmem_cap = 64 << 20              # conservative fallback (v7x per-TC VMEM)
    budget = int(vmem_cap * 0.85)        # headroom for Mosaic internal scratch / semaphores

    def _vmem_est(tn_, tv_):
        return (2 * tn_ * D * itemsize       # activation tile (double-buffered)
                + 2 * D * tv_ * itemsize     # streamed weight tile (double-buffered)
                + 2 * 8 * tv_ * 4            # streamed bias tile
                + 2 * tn_ * tv_ * 4          # (tn, tv) output block
                + 4 * tn_ * 4                # running max / sum scratch
                + (2 << 20))                 # slack

    while _vmem_est(tn, tv) > budget and tn > sub_rows:
        tn = max(sub_rows, _round_up(tn // 2, sub_rows))
    vmem_limit = int(min(max(_vmem_est(tn, tv), 16 << 20), budget))

    Np = _round_up(N, tn)
    num_n = Np // tn
    num_sub = 2 if (tv % 256 == 0) else 1
    # Note: for decode-shaped inputs (num_n == 1) one TensorCore idles on v7x; splitting the
    # vocab axis across cores with a tiny lse combine would recover it.

    # ---- operand preparation -------------------------------------------------
    x2 = x.reshape(N, D).astype(compute_dtype)
    if Np != N:
        x2 = jnp.pad(x2, ((0, Np - N), (0, 0)))
    # Pre-transposed (D, V) weight: contraction dim lands on the sublane axis of the RHS
    # tile, so Mosaic needs no per-step XLU transpose; transpose fuses with the dtype cast.
    w_t = weight.T.astype(compute_dtype)
    b2 = bias.astype(jnp.float32).reshape(1, V)
    if Vp != V:
        # Padded vocab columns: zero weights + hugely negative (finite) bias so they
        # contribute ~0 to the log-sum-exp and stay finite in 'logits - lse'.
        neg = float(jnp.finfo(jnp.float32).min) / 2
        w_t = jnp.pad(w_t, ((0, 0), (0, Vp - V)))
        b2 = jnp.pad(b2, ((0, 0), (0, Vp - V)), constant_values=neg)

    cost = pl.CostEstimate(
        flops=int(2 * 2 * Np * D * Vp),                       # two sweeps over the vocab
        transcendentals=int(Np * Vp + Np * num_v),            # exp (sweep 0) + log
        bytes_accessed=int(Np * D * itemsize                  # resident activations
                           + 2 * num_n * Vp * D * itemsize    # weight streamed 2x per row tile
                           + 2 * num_n * Vp * 4               # bias
                           + Np * Vp * jnp.dtype(out_dtype).itemsize),
    )

    out = pl.pallas_call(
        functools.partial(projection_kernel, num_sub=num_sub),
        out_shape=jax.ShapeDtypeStruct((Np, Vp), out_dtype),
        grid_spec=pltpu.PrefetchScalarGridSpec(
            num_scalar_prefetch=0,
            grid=(num_n, 2, num_v),
            in_specs=[
                pl.BlockSpec((tn, D), lambda i, s, j: (i, 0)),   # rows: resident per row tile
                pl.BlockSpec((D, tv), lambda i, s, j: (0, j)),   # weight: streamed over vocab
                pl.BlockSpec((1, tv), lambda i, s, j: (0, j)),   # bias: streamed over vocab
            ],
            # Sweep 0 parks the output window on block (i, 0) and never writes it (no stale
            # writebacks happen because the block index doesn't change until sweep 1 has
            # overwritten it); sweep 1 writes each (i, j) block exactly once.
            out_specs=pl.BlockSpec((tn, tv), lambda i, s, j: (i, s * j)),
            scratch_shapes=[
                pltpu.VMEM((tn, 1), jnp.float32),   # running max (holds lse after sweep 0)
                pltpu.VMEM((tn, 1), jnp.float32),   # running sum(exp)
            ],
        ),
        compiler_params=pltpu.CompilerParams(
            dimension_semantics=("parallel", "arbitrary", "arbitrary"),
            vmem_limit_bytes=vmem_limit,
        ),
        cost_estimate=cost,
    )(x2, w_t, b2)

    return out[:N, :V].reshape(B, S, V)


def reference(x, weight, bias):
    logits = jnp.einsum("bsd,vd->bsv", x, weight) + bias
    return jax.nn.log_softmax(logits, axis=-1)


if __name__ == "__main__":
    key = jax.random.PRNGKey(0)

    # Shapes implied by the module: (batch, seq, d_model) -> (batch, seq, vocab).
    B, S, D, V = 2, 8, 32, 128
    kx, kw, kb = jax.random.split(key, 3)
    x = jax.random.normal(kx, (B, S, D), dtype=jnp.float32)
    bound = 1.0 / math.sqrt(D)   # nn.Linear default init range
    weight = jax.random.uniform(kw, (V, D), minval=-bound, maxval=bound, dtype=jnp.float32)
    bias = jax.random.uniform(kb, (V,), minval=-bound, maxval=bound, dtype=jnp.float32)

    ref = reference(x, weight, bias)

    # 1) f32 MXU path — parity with the PyTorch module.
    out = jax.block_until_ready(projection_layer(x, weight, bias, compute_dtype=jnp.float32))
    assert out.shape == (B, S, V)
    assert jnp.allclose(out, ref, atol=1e-4, rtol=1e-4), "f32 mismatch vs reference"

    # 2) Default bf16 MXU-input path (perf default); accumulation + epilogue stay f32.
    out_bf16 = jax.block_until_ready(projection_layer(x, weight, bias))
    assert jnp.allclose(out_bf16, ref, atol=5e-2, rtol=5e-2), "bf16 mismatch vs reference"

    # 3) Ragged rows + multi-tile vocab streaming (exercises padding, the two-sweep online
    #    LSE, and multiple row tiles).
    B2, S2, V2 = 2, 5, 200
    kx2, kw2, kb2 = jax.random.split(jax.random.PRNGKey(1), 3)
    x2 = jax.random.normal(kx2, (B2, S2, D), dtype=jnp.float32)
    w2 = jax.random.uniform(kw2, (V2, D), minval=-bound, maxval=bound, dtype=jnp.float32)
    b2 = jax.random.uniform(kb2, (V2,), minval=-bound, maxval=bound, dtype=jnp.float32)
    out2 = jax.block_until_ready(
        projection_layer(x2, w2, b2, tile_n=8, tile_v=128, compute_dtype=jnp.float32))
    assert out2.shape == (B2, S2, V2)
    assert jnp.allclose(out2, reference(x2, w2, b2), atol=1e-4, rtol=1e-4), \
        "padded/streamed mismatch vs reference"

    print("KERNEL_OK")
</pallas_src>

<mosaic_0001>
module attributes {stable_mosaic.version = 11 : i64} {
  func.func @projection_kernel(%arg0: i32, %arg1: i32, %arg2: i32, %arg3: memref<16x32xf32, #tpu.memory_space<vmem>>, %arg4: memref<32x128xf32, #tpu.memory_space<vmem>>, %arg5: memref<1x128xf32, #tpu.memory_space<vmem>>, %arg6: memref<16x128xf32, #tpu.memory_space<vmem>>, %arg7: memref<16x1xf32, #tpu.memory_space<vmem>>, %arg8: memref<16x1xf32, #tpu.memory_space<vmem>>) attributes {dimension_semantics = [#tpu.dimension_semantics<parallel>, #tpu.dimension_semantics<arbitrary>, #tpu.dimension_semantics<arbitrary>], iteration_bounds = array<i64: 1, 2, 1>, scalar_prefetch = 0 : i64, scratch_operands = 2 : i64, tpu.core_type = #tpu.core_type<tc>, window_params = [{transform_indices = @transform_0, window_bounds = array<i64: 16, 32>}, {transform_indices = @transform_1, window_bounds = array<i64: 32, 128>}, {transform_indices = @transform_2, window_bounds = array<i64: 1, 128>}, {transform_indices = @transform_3, window_bounds = array<i64: 16, 128>}]} {
    %c0_i32 = arith.constant 0 : i32
    %0 = arith.cmpi eq, %arg1, %c0_i32 : i32
    %c0_i32_0 = arith.constant 0 : i32
    %1 = arith.cmpi eq, %arg2, %c0_i32_0 : i32
    %2 = arith.andi %0, %1 : i1
    %3 = arith.extui %2 : i1 to i32
    %c0_i32_1 = arith.constant 0 : i32
    %4 = arith.cmpi ne, %3, %c0_i32_1 : i32
    scf.if %4 {
      %cst = arith.constant 0xFF800000 : f32
      %16 = vector.broadcast %cst : f32 to vector<16x1xf32>
      %c0 = arith.constant 0 : index
      %c0_8 = arith.constant 0 : index
      %17 = vector.load %arg7[%c0, %c0_8] : memref<16x1xf32, #tpu.memory_space<vmem>>, vector<16x1xf32>
      tpu.vector_store %arg7[%c0, %c0_8], %16 {strides = array<i32>} : memref<16x1xf32, #tpu.memory_space<vmem>>, vector<16x1xf32>,
      %cst_9 = arith.constant 0.000000e+00 : f32
      %18 = vector.broadcast %cst_9 : f32 to vector<16x1xf32>
      %c0_10 = arith.constant 0 : index
      %c0_11 = arith.constant 0 : index
      %19 = vector.load %arg8[%c0_10, %c0_11] : memref<16x1xf32, #tpu.memory_space<vmem>>, vector<16x1xf32>
      tpu.vector_store %arg8[%c0_10, %c0_11], %18 {strides = array<i32>} : memref<16x1xf32, #tpu.memory_space<vmem>>, vector<16x1xf32>,
    } else {
    }
    %c0_i32_2 = arith.constant 0 : i32
    %5 = arith.cmpi eq, %arg1, %c0_i32_2 : i32
    %6 = arith.extui %5 : i1 to i32
    %c0_i32_3 = arith.constant 0 : i32
    %7 = arith.cmpi ne, %6, %c0_i32_3 : i32
    scf.if %7 {
      %c0 = arith.constant 0 : index
      %c0_8 = arith.constant 0 : index
      %16 = vector.load %arg3[%c0, %c0_8] : memref<16x32xf32, #tpu.memory_space<vmem>>, vector<16x32xf32>
      %c0_9 = arith.constant 0 : index
      %c0_10 = arith.constant 0 : index
      %17 = vector.load %arg4[%c0_9, %c0_10] : memref<32x128xf32, #tpu.memory_space<vmem>>, vector<32x128xf32>
      %cst = arith.constant dense<0.000000e+00> : vector<16x128xf32>
      %18 = tpu.matmul %16, %17, %cst {dimension_numbers = #tpu.dot_dimension_numbers<[1], [0], [0], [1], [0, 0, 1, 1], [], []>} : vector<16x32xf32>, vector<32x128xf32>, vector<16x128xf32> -> vector<16x128xf32>
      %c0_11 = arith.constant 0 : index
      %c0_12 = arith.constant 0 : index
      %19 = vector.load %arg5[%c0_11, %c0_12] : memref<1x128xf32, #tpu.memory_space<vmem>>, vector<1x128xf32>
      %20 = vector.broadcast %19 : vector<1x128xf32> to vector<16x128xf32>
      %21 = arith.addf %18, %20 : vector<16x128xf32>
      %c0_13 = arith.constant 0 : index
      %c0_14 = arith.constant 0 : index
      %22 = vector.load %arg7[%c0_13, %c0_14] : memref<16x1xf32, #tpu.memory_space<vmem>>, vector<16x1xf32>
      %cst_15 = arith.constant dense<0xFF800000> : vector<16xf32>
      %23 = vector.multi_reduction <maximumf>, %21, %cst_15 [1] : vector<16x128xf32> to vector<16xf32>
      %24 = vector.shape_cast %23 : vector<16xf32> to vector<16x1xf32>
      %25 = arith.maximumf %22, %24 : vector<16x1xf32>
      %c0_16 = arith.constant 0 : index
      %c0_17 = arith.constant 0 : index
      %26 = vector.load %arg8[%c0_16, %c0_17] : memref<16x1xf32, #tpu.memory_space<vmem>>, vector<16x1xf32>
      %27 = arith.subf %22, %25 : vector<16x1xf32>
      %28 = math.exp %27 : vector<16x1xf32>
      %29 = arith.mulf %26, %28 : vector<16x1xf32>
      %30 = vector.broadcast %25 : vector<16x1xf32> to vector<16x128xf32>
      %31 = arith.subf %21, %30 : vector<16x128xf32>
      %32 = math.exp %31 : vector<16x128xf32>
      %cst_18 = arith.constant dense<0.000000e+00> : vector<16xf32>
      %33 = vector.multi_reduction <add>, %32, %cst_18 [1] : vector<16x128xf32> to vector<16xf32>
      %34 = vector.shape_cast %33 : vector<16xf32> to vector<16x1xf32>
      %35 = arith.addf %29, %34 : vector<16x1xf32>
      %c0_19 = arith.constant 0 : index
      %c0_20 = arith.constant 0 : index
      %36 = vector.load %arg8[%c0_19, %c0_20] : memref<16x1xf32, #tpu.memory_space<vmem>>, vector<16x1xf32>
      tpu.vector_store %arg8[%c0_19, %c0_20], %35 {strides = array<i32>} : memref<16x1xf32, #tpu.memory_space<vmem>>, vector<16x1xf32>,
      %c0_21 = arith.constant 0 : index
      %c0_22 = arith.constant 0 : index
      %37 = vector.load %arg7[%c0_21, %c0_22] : memref<16x1xf32, #tpu.memory_space<vmem>>, vector<16x1xf32>
      tpu.vector_store %arg7[%c0_21, %c0_22], %25 {strides = array<i32>} : memref<16x1xf32, #tpu.memory_space<vmem>>, vector<16x1xf32>,
    } else {
    }
    %c0_i32_4 = arith.constant 0 : i32
    %8 = arith.cmpi eq, %arg1, %c0_i32_4 : i32
    %c0_i32_5 = arith.constant 0 : i32
    %9 = arith.cmpi eq, %arg2, %c0_i32_5 : i32
    %10 = arith.andi %8, %9 : i1
    %11 = arith.extui %10 : i1 to i32
    %c0_i32_6 = arith.constant 0 : i32
    %12 = arith.cmpi ne, %11, %c0_i32_6 : i32
    scf.if %12 {
      %c0 = arith.constant 0 : index
      %c0_8 = arith.constant 0 : index
      %16 = vector.load %arg7[%c0, %c0_8] : memref<16x1xf32, #tpu.memory_space<vmem>>, vector<16x1xf32>
      %c0_9 = arith.constant 0 : index
      %c0_10 = arith.constant 0 : index
      %17 = vector.load %arg8[%c0_9, %c0_10] : memref<16x1xf32, #tpu.memory_space<vmem>>, vector<16x1xf32>
      %18 = math.log %17 : vector<16x1xf32>
      %19 = arith.addf %16, %18 : vector<16x1xf32>
      %c0_11 = arith.constant 0 : index
      %c0_12 = arith.constant 0 : index
      %20 = vector.load %arg7[%c0_11, %c0_12] : memref<16x1xf32, #tpu.memory_space<vmem>>, vector<16x1xf32>
      tpu.vector_store %arg7[%c0_11, %c0_12], %19 {strides = array<i32>} : memref<16x1xf32, #tpu.memory_space<vmem>>, vector<16x1xf32>,
    } else {
    }
    %c1_i32 = arith.constant 1 : i32
    %13 = arith.cmpi eq, %arg1, %c1_i32 : i32
    %14 = arith.extui %13 : i1 to i32
    %c0_i32_7 = arith.constant 0 : i32
    %15 = arith.cmpi ne, %14, %c0_i32_7 : i32
    scf.if %15 {
      %c0 = arith.constant 0 : index
      %c0_8 = arith.constant 0 : index
      %16 = vector.load %arg3[%c0, %c0_8] : memref<16x32xf32, #tpu.memory_space<vmem>>, vector<16x32xf32>
      %c0_9 = arith.constant 0 : index
      %c0_10 = arith.constant 0 : index
      %17 = vector.load %arg4[%c0_9, %c0_10] : memref<32x128xf32, #tpu.memory_space<vmem>>, vector<32x128xf32>
      %cst = arith.constant dense<0.000000e+00> : vector<16x128xf32>
      %18 = tpu.matmul %16, %17, %cst {dimension_numbers = #tpu.dot_dimension_numbers<[1], [0], [0], [1], [0, 0, 1, 1], [], []>} : vector<16x32xf32>, vector<32x128xf32>, vector<16x128xf32> -> vector<16x128xf32>
      %c0_11 = arith.constant 0 : index
      %c0_12 = arith.constant 0 : index
      %19 = vector.load %arg5[%c0_11, %c0_12] : memref<1x128xf32, #tpu.memory_space<vmem>>, vector<1x128xf32>
      %20 = vector.broadcast %19 : vector<1x128xf32> to vector<16x128xf32>
      %21 = arith.addf %18, %20 : vector<16x128xf32>
      %c0_13 = arith.constant 0 : index
      %c0_14 = arith.constant 0 : index
      %22 = vector.load %arg7[%c0_13, %c0_14] : memref<16x1xf32, #tpu.memory_space<vmem>>, vector<16x1xf32>
      %23 = vector.broadcast %22 : vector<16x1xf32> to vector<16x128xf32>
      %24 = arith.subf %21, %23 : vector<16x128xf32>
      %c0_15 = arith.constant 0 : index
      %c0_16 = arith.constant 0 : index
      %25 = vector.load %arg6[%c0_15, %c0_16] : memref<16x128xf32, #tpu.memory_space<vmem>>, vector<16x128xf32>
      tpu.vector_store %arg6[%c0_15, %c0_16], %24 {strides = array<i32>} : memref<16x128xf32, #tpu.memory_space<vmem>>, vector<16x128xf32>,
    } else {
    }
    return
  }
  func.func @transform_0(%arg0: i32, %arg1: i32, %arg2: i32) -> (i32, i32) {
    %c0_i32 = arith.constant 0 : i32
    %c0_i32_0 = arith.constant 0 : i32
    return %arg0, %c0_i32 : i32, i32
  }
  func.func @transform_1(%arg0: i32, %arg1: i32, %arg2: i32) -> (i32, i32) {
    %c0_i32 = arith.constant 0 : i32
    %c0_i32_0 = arith.constant 0 : i32
    return %c0_i32, %arg2 : i32, i32
  }
  func.func @transform_2(%arg0: i32, %arg1: i32, %arg2: i32) -> (i32, i32) {
    %c0_i32 = arith.constant 0 : i32
    %c0_i32_0 = arith.constant 0 : i32
    return %c0_i32, %arg2 : i32, i32
  }
  func.func @transform_3(%arg0: i32, %arg1: i32, %arg2: i32) -> (i32, i32) {
    %0 = arith.muli %arg1, %arg2 : i32
    %c0_i32 = arith.constant 0 : i32
    return %arg0, %0 : i32, i32
  }
}

</mosaic_0001>

<llo_original>
// kernel: tpu_custom_call.1
$region0: #{tpu_custom_call.1}
  #allocation0 [shape = 'u32[]', space=smem, size = 0x4, offset = 0x4, fixed_abs, tag = 'smem constant byte address 0x4 - core index']
  #allocation1 [shape = 'u32[144,128]{1,0:T(1,128)}', space=vmem, size = 0x12000, scoped, tag = 'internal scratch']
  #allocation2 [shape = 'f32[16,1]{1,0:T(8,128)}', space=vmem, size = 0x2000, scoped, tag = 'scratch operand']
  #allocation3 [shape = 'f32[16,1]{1,0:T(8,128)}', space=vmem, size = 0x2000, scoped, tag = 'scratch operand']
  %s0 = inlined_call_operand.hbm [shape: f32[16,32], index: 0, kind: input, shape index: {}]
  %s1 = inlined_call_operand.hbm [shape: f32[32,128], index: 1, kind: input, shape index: {}]
  %s2 = inlined_call_operand.vmem [shape: f32[1,128], index: 2, kind: input, shape index: {}]
  %s3 = inlined_call_operand.hbm [shape: f32[16,128], index: 3, kind: output, shape index: {}]
  %s4 = sld [smem:[#allocation0]]
  $region69: #{tpu_custom_call.1} parent=0
    _
  %s6 = ssub.s32 1, %s4
  %s7 = scalar_select 0, %s6, %s4
  $region1: #{tpu_custom_call.1} parent=0
    #allocation4 [shape = 'u8[8192]{0}', space=vmem, size = 0x2000, scoped, tag = 'input window, operand 0, single buffered']
    #allocation5 [shape = 's32[2]{0}', space=sflag, size = 0x8, scoped, tag = 'scoped memory for tpu_custom_call.1']
    #allocation6 [shape = 's32[2]{0}', space=sflag, size = 0x8, scoped, tag = 'scoped memory for tpu_custom_call.1']
    #allocation7 [shape = 'u8[16384]{0}', space=vmem, size = 0x4000, scoped, tag = 'input window, operand 1, single buffered']
    #allocation8 [shape = 's32[1]{0}', space=sflag, size = 0x4, scoped, tag = 'scoped memory for tpu_custom_call.1']
    #allocation9 [shape = 'u8[16384]{0}', space=vmem, size = 0x4000, scoped, tag = 'output window, operand 0']
    %8 = vsyncpa [#allocation5], 0
    %9 = vsyncpa [#allocation8], 0
    %10 = vsyncpa [#allocation6], 0
    %s11 = scalar_lea.sflag [#allocation6], 1
    %12 = vsyncpa %s11, 0
    loop: start=0, step=1, limit=4
    $region2: #{tpu_custom_call.1} parent=1 // loop_pre_header
      _
    $region3: #{tpu_custom_call.1} parent=1 // loop_header
      %s14 = sphi 0, %s18
      %p15 = scmp.ge.s32.totalorder %s14, 4
      %s21 = sphi 0, %s40
      %s22 = sphi 0, %s36
      %s23 = sphi 0, %s32
      %s24 = sphi 0, %s21
      %s25 = sphi 0, %s22
      %s26 = sphi 0, %s23
      %s27 = sphi 0, %s24
      %s28 = sphi 0, %s25
      %s29 = sphi 0, %s26
      %s43 = sphi 0, %s45
      %s46 = sphi 0, %s43
      %s47 = sphi 0, %s46
      %s63 = sphi 0, %s47
      %s69 = sphi 0, %s71
      %s72 = sphi 0, %s69
      %s73 = sphi 0, %s72
      %s89 = sphi 0, %s73
      %s95 = sphi 0, %s97
      %s98 = sphi 0, %s95
      %s99 = sphi 0, %s98
      %s115 = sphi 0, %s99
      %s125 = sphi 0, %s127
      %s128 = sphi 0, %s125
      %s129 = sphi 0, %s128
      %s145 = sphi 0, %s129
    $region4: #{tpu_custom_call.1} parent=1 // loop_header_branch
      %17 = sbr.rel (%p15) target = $region8
    $region5: #{tpu_custom_call.1} parent=1 // loop_body
      %s19 = ssub.s32 %s14, 1
      %s20 = ssub.s32 %s14, 2
      %s30 = sadd.s32 1, %s23
      %p31 = scmp.ge.s32.totalorder %s30, 1
      %s32 = scalar_select %p31, 0, %s30
      %s33 = sadd.s32 1, %s22
      %s34 = scalar_select %p31, %s33, %s22
      %p35 = scmp.ge.s32.totalorder %s34, 2
      %s36 = scalar_select %p35, 0, %s34
      %s37 = sadd.s32 1, %s21
      %s38 = scalar_select %p35, %s37, %s21
      %p39 = scmp.ge.s32.totalorder %s38, 1
      %s40 = scalar_select %p39, 0, %s38
      %s41 = ssub.s32 %s21, %s40
      %p42 = scmp.eq.s32.totalorder %s41, 0
      %s44 = sadd.s32 %s43, 1
      %s45 = scalar_select %p42, %s43, %s44
      %p48 = pneg %p42
      %p49 = scmp.eq.s32.totalorder %s14, 1
      %p50 = por %p48, %p49
      %p51 = scmp.ne.s32.totalorder %s43, %s46
      %p52 = scmp.eq.s32.totalorder %s14, 0
      %p53 = por %p51, %p52
      %p54 = scmp.ne.s32.totalorder %s43, %s46
      %p55 = scmp.eq.s32.totalorder %s19, 1
      %p56 = por %p54, %p55
      %p57 = scmp.ne.s32.totalorder %s46, %s47
      %p58 = scmp.eq.s32.totalorder %s19, 0
      %p59 = por %p57, %p58
      %p60 = scmp.ne.s32.totalorder %s46, %s47
      %p61 = scmp.eq.s32.totalorder %s20, 1
      %p62 = por %p60, %p61
      %p64 = scmp.ne.s32.totalorder %s47, %s63
      %p65 = scmp.eq.s32.totalorder %s20, 0
      %p66 = por %p64, %p65
      %s67 = ssub.s32 %s23, %s32
      %p68 = scmp.eq.s32.totalorder %s67, 0
      %s70 = sadd.s32 %s69, 1
      %s71 = scalar_select %p68, %s69, %s70
      %p74 = pneg %p68
      %p75 = scmp.eq.s32.totalorder %s14, 1
      %p76 = por %p74, %p75
      %p77 = scmp.ne.s32.totalorder %s69, %s72
      %p78 = scmp.eq.s32.totalorder %s14, 0
      %p79 = por %p77, %p78
      %p80 = scmp.ne.s32.totalorder %s69, %s72
      %p81 = scmp.eq.s32.totalorder %s19, 1
      %p82 = por %p80, %p81
      %p83 = scmp.ne.s32.totalorder %s72, %s73
      %p84 = scmp.eq.s32.totalorder %s19, 0
      %p85 = por %p83, %p84
      %p86 = scmp.ne.s32.totalorder %s72, %s73
      %p87 = scmp.eq.s32.totalorder %s20, 1
      %p88 = por %p86, %p87
      %p90 = scmp.ne.s32.totalorder %s73, %s89
      %p91 = scmp.eq.s32.totalorder %s20, 0
      %p92 = por %p90, %p91
      %s93 = ssub.s32 %s23, %s32
      %p94 = scmp.eq.s32.totalorder %s93, 0
      %s96 = sadd.s32 %s95, 1
      %s97 = scalar_select %p94, %s95, %s96
      %p100 = pneg %p94
      %p101 = scmp.eq.s32.totalorder %s14, 1
      %p102 = por %p100, %p101
      %p103 = scmp.ne.s32.totalorder %s95, %s98
      %p104 = scmp.eq.s32.totalorder %s14, 0
      %p105 = por %p103, %p104
      %p106 = scmp.ne.s32.totalorder %s95, %s98
      %p107 = scmp.eq.s32.totalorder %s19, 1
      %p108 = por %p106, %p107
      %p109 = scmp.ne.s32.totalorder %s98, %s99
      %p110 = scmp.eq.s32.totalorder %s19, 0
      %p111 = por %p109, %p110
      %p112 = scmp.ne.s32.totalorder %s98, %s99
      %p113 = scmp.eq.s32.totalorder %s20, 1
      %p114 = por %p112, %p113
      %p116 = scmp.ne.s32.totalorder %s99, %s115
      %p117 = scmp.eq.s32.totalorder %s20, 0
      %p118 = por %p116, %p117
      %s119 = smul.u32 %s22, %s23
      %s120 = smul.u32 %s36, %s32
      %s121 = ssub.s32 %s21, %s40
      %s122 = ssub.s32 %s119, %s120
      %s123 = sor.u32 %s121, %s122
      %p124 = scmp.eq.s32.totalorder %s123, 0
      %s126 = sadd.s32 %s125, 1
      %s127 = scalar_select %p124, %s125, %s126
      %p130 = pneg %p124
      %p131 = scmp.eq.s32.totalorder %s14, 1
      %p132 = por %p130, %p131
      %p133 = scmp.ne.s32.totalorder %s125, %s128
      %p134 = scmp.eq.s32.totalorder %s14, 0
      %p135 = por %p133, %p134
      %p136 = scmp.ne.s32.totalorder %s125, %s128
      %p137 = scmp.eq.s32.totalorder %s19, 1
      %p138 = por %p136, %p137
      %p139 = scmp.ne.s32.totalorder %s128, %s129
      %p140 = scmp.eq.s32.totalorder %s19, 0
      %p141 = por %p139, %p140
      %p142 = scmp.ne.s32.totalorder %s128, %s129
      %p143 = scmp.eq.s32.totalorder %s20, 1
      %p144 = por %p142, %p143
      %p146 = scmp.ne.s32.totalorder %s129, %s145
      %p147 = scmp.eq.s32.totalorder %s20, 0
      %p148 = por %p146, %p147
      %p149 = scmp.le.s32.totalorder 1, %s14
      %p150 = scmp.lt.s32.totalorder %s14, 3
      %p151 = pnand %p149, %p150
      %p152 = pneg %p151
      // Predicated region
      $region9: #{tpu_custom_call.1} parent=5 // pred_check
        _
      $region10: #{tpu_custom_call.1} parent=5 // pred_check_branch
        %154 = sbr.rel (%p151) target = $region12
      $region11: #{tpu_custom_call.1} parent=5 // pred_region
        %s155 = ssub.s32 %s14, 1
        // Predicated region
        $region13: #{tpu_custom_call.1} parent=11 // pred_check
          %p156 = pneg %p59
        $region14: #{tpu_custom_call.1} parent=11 // pred_check_branch
          %158 = sbr.rel (%p156) target = $region16
        $region15: #{tpu_custom_call.1} parent=11 // pred_region
          %s159 = smul.u32 2, %s24
          %s161 = ssub.s32 256, 256
          %162 = vsyncadd [#allocation5], %s161
          %s163 = smul.addr %s159, 128
          %s164 = scalar_lea.hbm %s0, %s163
          %s165 = sshll.u32 [#allocation4], 4
          %s166 = int_to_ptr.vmem [resolvable:$true] %s165
          %171 = dma.hbm_to_vmem [thread:$0]  %s164, 256, %s166, [#allocation5], 128, 128, 8
        $region16: #{tpu_custom_call.1} parent=11 // pred_fallthru
          _
        // Predicated region
        $region17: #{tpu_custom_call.1} parent=11 // pred_check
          %p172 = pneg %p85
        $region18: #{tpu_custom_call.1} parent=11 // pred_check_branch
          %174 = sbr.rel (%p172) target = $region20
        $region19: #{tpu_custom_call.1} parent=11 // pred_region
          %s176 = ssub.s32 512, 512
          %177 = vsyncadd [#allocation8], %s176
          %s178 = smul.addr %s26, 128
          %s179 = scalar_lea.hbm %s1, %s178
          %s180 = sshll.u32 [#allocation7], 4
          %s181 = int_to_ptr.vmem [resolvable:$true] %s180
          %186 = dma.hbm_to_vmem [thread:$0]  %s179, 512, %s181, [#allocation8], 128, 128, 8
        $region20: #{tpu_custom_call.1} parent=11 // pred_fallthru
          _
        // Predicated region
        $region21: #{tpu_custom_call.1} parent=11 // pred_check
          %p187 = pneg %p111
        $region22: #{tpu_custom_call.1} parent=11 // pred_check_branch
          %189 = sbr.rel (%p187) target = $region24
        $region23: #{tpu_custom_call.1} parent=11 // pred_region
          %p190 = scmp.lt.s32.totalorder %s26, 0
          %s191 = scalar_select %p190, %s26, 0
          %s192 = scalar_lea.vmem %s2, %s191
        $region24: #{tpu_custom_call.1} parent=11 // pred_fallthru
          _
      $region12: #{tpu_custom_call.1} parent=5 // pred_fallthru
        _
      %p193 = scmp.lt.s32.totalorder %s14, 2
      // Predicated region
      $region25: #{tpu_custom_call.1} parent=5 // pred_check
        %p194 = pneg %p193
      $region26: #{tpu_custom_call.1} parent=5 // pred_check_branch
        %196 = sbr.rel (%p194) target = $region28
      $region27: #{tpu_custom_call.1} parent=5 // pred_region
        _
      $region28: #{tpu_custom_call.1} parent=5 // pred_fallthru
        _
      %p197 = scmp.le.s32.totalorder 1, %s14
      %p198 = scmp.lt.s32.totalorder %s14, 3
      %p199 = pnand %p197, %p198
      %p200 = pneg %p199
      // Predicated region
      $region29: #{tpu_custom_call.1} parent=5 // pred_check
        _
      $region30: #{tpu_custom_call.1} parent=5 // pred_check_branch
        %202 = sbr.rel (%p199) target = $region32
      $region31: #{tpu_custom_call.1} parent=5 // pred_region
        %s203 = ssub.s32 %s14, 1
        // Predicated region
        $region33: #{tpu_custom_call.1} parent=31 // pred_check
          %p204 = pneg %p59
        $region34: #{tpu_custom_call.1} parent=31 // pred_check_branch
          %206 = sbr.rel (%p204) target = $region36
        $region35: #{tpu_custom_call.1} parent=31 // pred_region
          %207 = dma.done [#allocation5], 256
        $region36: #{tpu_custom_call.1} parent=31 // pred_fallthru
          _
        // Predicated region
        $region37: #{tpu_custom_call.1} parent=31 // pred_check
          %p208 = pneg %p85
        $region38: #{tpu_custom_call.1} parent=31 // pred_check_branch
          %210 = sbr.rel (%p208) target = $region40
        $region39: #{tpu_custom_call.1} parent=31 // pred_region
          %211 = dma.done [#allocation8], 512
        $region40: #{tpu_custom_call.1} parent=31 // pred_fallthru
          _
        %p212 = pneg %p59
        %p213 = pneg %p56
        %p214 = pneg %p85
        %p215 = pneg %p82
        %p216 = scmp.lt.s32.totalorder %s26, 0
        %s217 = scalar_select %p216, %s26, 0
        %s218 = scalar_lea.vmem %s2, %s217
        %p219 = pneg %p111
        %p220 = pneg %p108
        %p221 = pneg %p141
        %p222 = pneg %p138
        %s223 = sand.u32 %s128, 1
        %s224 = scalar_lea.sflag [#allocation6], %s223
        %s225 = sand.u32 %s128, 1
        %s226 = smul.addr %s225, 16
        %s227 = scalar_lea.vmem [#allocation9], %s226
        %s228 = smul.u32 2, %s24
        %p229 = scmp.lt.s32.totalorder %s26, 0
        %s230 = scalar_select %p229, %s26, 0
        %s231 = scalar_lea.vmem %s2, %s230
        %s232 = smul.u32 %s25, %s26
        %s233 = smul.u32 2, %s24
        %p234 = scmp.eq.s32.totalorder %s25, 0
        %p235 = scmp.eq.s32.totalorder %s26, 0
        %p236 = pnand %p234, %p235
        %p237 = pneg %p236
        // Predicated region
        $region41: #{tpu_custom_call.1} parent=31 // pred_check
          _
        $region42: #{tpu_custom_call.1} parent=31 // pred_check_branch
          %239 = sbr.rel (%p236) target = $region44
        $region43: #{tpu_custom_call.1} parent=31 // pred_region
          %vm240 = vcmask 7168
          %241 = vst.msk [vmem:[#allocation2] sm:$0xff] %vm240, -inf
          %242 = vst.msk [vmem:[#allocation2 + $0x8] sm:$0xff] %vm240, -inf
          %243 = vst.msk [vmem:[#allocation3] sm:$0xff] %vm240, 0.0
          %244 = vst.msk [vmem:[#allocation3 + $0x8] sm:$0xff] %vm240, 0.0
        $region44: #{tpu_custom_call.1} parent=31 // pred_fallthru
          _
        // Predicated region
        $region45: #{tpu_custom_call.1} parent=31 // pred_check
          %p245 = pneg %p234
        $region46: #{tpu_custom_call.1} parent=31 // pred_check_branch
          %247 = sbr.rel (%p245) target = $region48
        $region47: #{tpu_custom_call.1} parent=31 // pred_region
          %v248 = vld [vmem:[#allocation4] sm:$0xff]
          %v249 = vld [vmem:[#allocation4 + $0x8] sm:$0xff]
          %v250 = vld [vmem:[#allocation7] sm:$0xff]
          %v251 = vld [vmem:[#allocation7 + $0x8] sm:$0xff]
          %v252 = vld [vmem:[#allocation7 + $0x10] sm:$0xff]
          %v253 = vld [vmem:[#allocation7 + $0x18] sm:$0xff]
          %v254 = vld [vmem:[%s231] sm:$0x1]
          %v256 = vlaneseq
          %v257 = vshrl.u32 %v256, 7
          %v258 = vsub.s32 0, %v257
          %v259 = vrot.slane %v254, %v258
          %vm261 = vcmask 261120
          %v263 = vsel %vm261, %v248, 0
          %v266 = vsel %vm261, %v249, 0
          %268 = vmatprep.subr.mxu0 0.0
          %269 = vmatpush1.msra.mxu0 %v250
          %270 = vmatprep.subr.mxu0 0.0
          %271 = vmatpush1.msra.mxu0 %v251
          %272 = vmatprep.subr.mxu0 0.0
          %273 = vmatpush1.msra.mxu0 %v252
          %274 = vmatprep.subr.mxu0 0.0
          %275 = vmatpush1.msra.mxu0 %v253
          %276 = vmatprep.subr.mxu0 0.0
          %277 = vmatpush1.msra.mxu0 0.0
          %278 = vmatprep.subr.mxu0 0.0
          %279 = vmatpush1.msra.mxu0 0.0
          %280 = vmatprep.subr.mxu0 0.0
          %281 = vmatpush1.msra.mxu0 0.0
          %282 = vmatprep.subr.mxu0 0.0
          %283 = vmatpush1.msra.mxu0 0.0
          %284 = vmatprep.subr.mxu0 0.0
          %285 = vmatpush1.msra.mxu0 0.0
          %286 = vmatprep.subr.mxu0 0.0
          %287 = vmatpush1.msra.mxu0 0.0
          %288 = vmatprep.subr.mxu0 0.0
          %289 = vmatpush1.msra.mxu0 0.0
          %290 = vmatprep.subr.mxu0 0.0
          %291 = vmatpush1.msra.mxu0 0.0
          %292 = vmatprep.subr.mxu0 0.0
          %293 = vmatpush1.msra.mxu0 0.0
          %294 = vmatprep.subr.mxu0 0.0
          %295 = vmatpush1.msra.mxu0 0.0
          %296 = vmatprep.subr.mxu0 0.0
          %297 = vmatpush1.msra.mxu0 0.0
          %298 = vmatprep.subr.mxu0 0.0
          %299 = vmatpush1.msra.mxu0 0.0
          %300 = vmatprep.subr.mxu0 0.0
          %301 = vmatpush1.msra.mxu0 0.0
          %302 = vmatprep.subr.mxu0 0.0
          %303 = vmatpush1.msra.mxu0 0.0
          %304 = vmatprep.subr.mxu0 0.0
          %305 = vmatpush1.msra.mxu0 0.0
          %306 = vmatprep.subr.mxu0 0.0
          %307 = vmatpush1.msra.mxu0 0.0
          %308 = vmatprep.subr.mxu0 0.0
          %309 = vmatpush1.msra.mxu0 0.0
          %310 = vmatprep.subr.mxu0 0.0
          %311 = vmatpush1.msra.mxu0 0.0
          %312 = vmatprep.subr.mxu0 0.0
          %313 = vmatpush1.msra.mxu0 0.0
          %314 = vmatprep.subr.mxu0 0.0
          %315 = vmatpush1.msra.mxu0 0.0
          %316 = vmatprep.subr.mxu0 0.0
          %317 = vmatpush1.msra.mxu0 0.0
          %318 = vmatprep.subr.mxu0 0.0
          %319 = vmatpush1.msra.mxu0 0.0
          %320 = vmatprep.subr.mxu0 0.0
          %321 = vmatpush1.msra.mxu0 0.0
          %322 = vmatprep.subr.mxu0 0.0
          %323 = vmatpush1.msra.mxu0 0.0
          %324 = vmatprep.subr.mxu0 0.0
          %325 = vmatpush1.msra.mxu0 0.0
          %326 = vmatprep.subr.mxu0 0.0
          %327 = vmatpush1.msra.mxu0 0.0
          %328 = vmatprep.subr.mxu0 0.0
          %329 = vmatpush1.msra.mxu0 0.0
          %330 = vmatprep.subr.mxu0 0.0
          %331 = vmatpush1.msra.mxu0 0.0
          %332 = vmatprep.mubr.f32.mxu0 0.0
          %333 = vmatmul.mubr.f32.gmra.mrb[0].mxu0 %v263
          %v334 = vpop.f32.mrb[0].mxu0
          %v335 = vadd.f32 %v259, %v334
          %v336 = vpop.f32.mrb[0].mxu0
          %337 = vmatprep.mubr.f32.mxu0 0.0
          %338 = vmatmul.mubr.f32.gmra.mrb[0].mxu0 %v266
          %v339 = vpop.f32.mrb[0].mxu0
          %v340 = vadd.f32 %v259, %v339
          %v341 = vpop.f32.mrb[0].mxu0
          %342 = vdwg.mxu0
          %v343 = vld [vmem:[#allocation2] sm:$0xff]
          %v344 = vld [vmem:[#allocation2 + $0x8] sm:$0xff]
          %345 = vmax.xlane.f32.xlu0 %v335
          %v346 = vpop.xlane.xlu0 %345
          %347 = vmax.xlane.f32.xlu0 %v340
          %v348 = vpop.xlane.xlu0 %347
          %v349 = vmax.f32 %v343, %v346
          %v350 = vmax.f32 %v344, %v348
          %v351 = vld [vmem:[#allocation3] sm:$0xff]
          %v352 = vld [vmem:[#allocation3 + $0x8] sm:$0xff]
          %v353 = vsub.f32 %v343, %v349
          %v354 = vsub.f32 %v344, %v350
          %v355 = vmul.f32 %v353, 1.442695
          %v356 = vpow.pop %v355
          %v357 = vmul.f32 %v354, 1.442695
          %v358 = vpow.pop %v357
          %v359 = vmul.f32 %v351, %v356
          %v360 = vmul.f32 %v352, %v358
          %362 = vset.pattern.permute.xlu0 0
          %363 = vperm.xlu0 %362, %v349
          %v364 = vpop.permute.xlu0 %363
          %367 = vset.pattern.permute.xlu0 0
          %368 = vperm.xlu0 %367, %v350
          %v369 = vpop.permute.xlu0 %368
          %v371 = vsub.f32 %v335, %v364
          %v372 = vsub.f32 %v340, %v369
          %v373 = vmul.f32 %v371, 1.442695
          %v374 = vpow.pop %v373
          %v375 = vmul.f32 %v372, 1.442695
          %v376 = vpow.pop %v375
          %377 = vadd.xlane.f32.xlu0 %v374
          %v378 = vpop.xlane.xlu0 %377
          %379 = vadd.xlane.f32.xlu0 %v376
          %v380 = vpop.xlane.xlu0 %379
          %v381 = vadd.f32 %v359, %v378
          %v382 = vadd.f32 %v360, %v380
          %vm383 = vcmask 7168
          %384 = vst.msk [vmem:[#allocation3] sm:$0xff] %vm383, %v381
          %385 = vst.msk [vmem:[#allocation3 + $0x8] sm:$0xff] %vm383, %v382
          %386 = vst.msk [vmem:[#allocation2] sm:$0xff] %vm383, %v349
          %387 = vst.msk [vmem:[#allocation2 + $0x8] sm:$0xff] %vm383, %v350
        $region48: #{tpu_custom_call.1} parent=31 // pred_fallthru
          _
        // Predicated region
        $region49: #{tpu_custom_call.1} parent=31 // pred_check
          _
        $region50: #{tpu_custom_call.1} parent=31 // pred_check_branch
          %389 = sbr.rel (%p236) target = $region52
        $region51: #{tpu_custom_call.1} parent=31 // pred_region
          %v390 = vld [vmem:[#allocation2] sm:$0xff]
          %v391 = vld [vmem:[#allocation2 + $0x8] sm:$0xff]
          %v392 = vld [vmem:[#allocation3] sm:$0xff]
          %v393 = vld [vmem:[#allocation3 + $0x8] sm:$0xff]
          %v394 = vlog2.pop %v392
          %v395 = vmul.f32 %v394, 0.6931472
          %v396 = vlog2.pop %v393
          %v397 = vmul.f32 %v396, 0.6931472
          %v398 = vadd.f32 %v390, %v395
          %v399 = vadd.f32 %v391, %v397
          %vm400 = vcmask 7168
          %401 = vst.msk [vmem:[#allocation2] sm:$0xff] %vm400, %v398
          %402 = vst.msk [vmem:[#allocation2 + $0x8] sm:$0xff] %vm400, %v399
        $region52: #{tpu_custom_call.1} parent=31 // pred_fallthru
          _
        %p403 = scmp.eq.s32.totalorder %s25, 1
        // Predicated region
        $region53: #{tpu_custom_call.1} parent=31 // pred_check
          %p404 = pneg %p403
        $region54: #{tpu_custom_call.1} parent=31 // pred_check_branch
          %406 = sbr.rel (%p404) target = $region56
        $region55: #{tpu_custom_call.1} parent=31 // pred_region
          %v407 = vld [vmem:[#allocation4] sm:$0xff]
          %v408 = vld [vmem:[#allocation4 + $0x8] sm:$0xff]
          %v409 = vld [vmem:[#allocation7] sm:$0xff]
          %v410 = vld [vmem:[#allocation7 + $0x8] sm:$0xff]
          %v411 = vld [vmem:[#allocation7 + $0x10] sm:$0xff]
          %v412 = vld [vmem:[#allocation7 + $0x18] sm:$0xff]
          %v413 = vld [vmem:[%s231] sm:$0x1]
          %v415 = vlaneseq
          %v416 = vshrl.u32 %v415, 7
          %v417 = vsub.s32 0, %v416
          %v418 = vrot.slane %v413, %v417
          %vm420 = vcmask 261120
          %v422 = vsel %vm420, %v407, 0
          %v425 = vsel %vm420, %v408, 0
          %427 = vmatprep.subr.mxu0 0.0
          %428 = vmatpush1.msra.mxu0 %v409
          %429 = vmatprep.subr.mxu0 0.0
          %430 = vmatpush1.msra.mxu0 %v410
          %431 = vmatprep.subr.mxu0 0.0
          %432 = vmatpush1.msra.mxu0 %v411
          %433 = vmatprep.subr.mxu0 0.0
          %434 = vmatpush1.msra.mxu0 %v412
          %435 = vmatprep.subr.mxu0 0.0
          %436 = vmatpush1.msra.mxu0 0.0
          %437 = vmatprep.subr.mxu0 0.0
          %438 = vmatpush1.msra.mxu0 0.0
          %439 = vmatprep.subr.mxu0 0.0
          %440 = vmatpush1.msra.mxu0 0.0
          %441 = vmatprep.subr.mxu0 0.0
          %442 = vmatpush1.msra.mxu0 0.0
          %443 = vmatprep.subr.mxu0 0.0
          %444 = vmatpush1.msra.mxu0 0.0
          %445 = vmatprep.subr.mxu0 0.0
          %446 = vmatpush1.msra.mxu0 0.0
          %447 = vmatprep.subr.mxu0 0.0
          %448 = vmatpush1.msra.mxu0 0.0
          %449 = vmatprep.subr.mxu0 0.0
          %450 = vmatpush1.msra.mxu0 0.0
          %451 = vmatprep.subr.mxu0 0.0
          %452 = vmatpush1.msra.mxu0 0.0
          %453 = vmatprep.subr.mxu0 0.0
          %454 = vmatpush1.msra.mxu0 0.0
          %455 = vmatprep.subr.mxu0 0.0
          %456 = vmatpush1.msra.mxu0 0.0
          %457 = vmatprep.subr.mxu0 0.0
          %458 = vmatpush1.msra.mxu0 0.0
          %459 = vmatprep.subr.mxu0 0.0
          %460 = vmatpush1.msra.mxu0 0.0
          %461 = vmatprep.subr.mxu0 0.0
          %462 = vmatpush1.msra.mxu0 0.0
          %463 = vmatprep.subr.mxu0 0.0
          %464 = vmatpush1.msra.mxu0 0.0
          %465 = vmatprep.subr.mxu0 0.0
          %466 = vmatpush1.msra.mxu0 0.0
          %467 = vmatprep.subr.mxu0 0.0
          %468 = vmatpush1.msra.mxu0 0.0
          %469 = vmatprep.subr.mxu0 0.0
          %470 = vmatpush1.msra.mxu0 0.0
          %471 = vmatprep.subr.mxu0 0.0
          %472 = vmatpush1.msra.mxu0 0.0
          %473 = vmatprep.subr.mxu0 0.0
          %474 = vmatpush1.msra.mxu0 0.0
          %475 = vmatprep.subr.mxu0 0.0
          %476 = vmatpush1.msra.mxu0 0.0
          %477 = vmatprep.subr.mxu0 0.0
          %478 = vmatpush1.msra.mxu0 0.0
          %479 = vmatprep.subr.mxu0 0.0
          %480 = vmatpush1.msra.mxu0 0.0
          %481 = vmatprep.subr.mxu0 0.0
          %482 = vmatpush1.msra.mxu0 0.0
          %483 = vmatprep.subr.mxu0 0.0
          %484 = vmatpush1.msra.mxu0 0.0
          %485 = vmatprep.subr.mxu0 0.0
          %486 = vmatpush1.msra.mxu0 0.0
          %487 = vmatprep.subr.mxu0 0.0
          %488 = vmatpush1.msra.mxu0 0.0
          %489 = vmatprep.subr.mxu0 0.0
          %490 = vmatpush1.msra.mxu0 0.0
          %491 = vmatprep.mubr.f32.mxu0 0.0
          %492 = vmatmul.mubr.f32.gmra.mrb[0].mxu0 %v422
          %v493 = vpop.f32.mrb[0].mxu0
          %v494 = vadd.f32 %v418, %v493
          %v495 = vpop.f32.mrb[0].mxu0
          %496 = vmatprep.mubr.f32.mxu0 0.0
          %497 = vmatmul.mubr.f32.gmra.mrb[0].mxu0 %v425
          %v498 = vpop.f32.mrb[0].mxu0
          %v499 = vadd.f32 %v418, %v498
          %v500 = vpop.f32.mrb[0].mxu0
          %501 = vdwg.mxu0
          %v502 = vld [vmem:[#allocation2] sm:$0xff]
          %v503 = vld [vmem:[#allocation2 + $0x8] sm:$0xff]
          %505 = vset.pattern.permute.xlu0 0
          %506 = vperm.xlu0 %505, %v502
          %v507 = vpop.permute.xlu0 %506
          %510 = vset.pattern.permute.xlu0 0
          %511 = vperm.xlu0 %510, %v503
          %v512 = vpop.permute.xlu0 %511
          %v514 = vsub.f32 %v494, %v507
          %v515 = vsub.f32 %v499, %v512
          %516 = vst [vmem:[%s227] sm:$0xff] %v514
          %517 = vst [vmem:[%s227 + $0x8] sm:$0xff] %v515
        $region56: #{tpu_custom_call.1} parent=31 // pred_fallthru
          _
        %s518 = sand.u32 %s128, 1
        %s519 = scalar_lea.sflag [#allocation6], %s518
        %s520 = sand.u32 %s128, 1
        %s521 = smul.addr %s520, 16
        %s522 = scalar_lea.vmem [#allocation9], %s521
        // Predicated region
        $region57: #{tpu_custom_call.1} parent=31 // pred_check
          %p523 = pneg %p138
        $region58: #{tpu_custom_call.1} parent=31 // pred_check_branch
          %525 = sbr.rel (%p523) target = $region60
        $region59: #{tpu_custom_call.1} parent=31 // pred_region
          %s526 = smul.u32 %s25, %s26
          %s527 = smul.u32 2, %s24
          %s529 = ssub.s32 256, 256
          %530 = vsyncadd %s519, %s529
          %s531 = sadd.s32 %s526, %s527
          %s532 = smul.addr %s531, 128
          %s533 = scalar_lea.hbm %s3, %s532
          %s534 = sshll.u32 %s522, 4
          %s535 = int_to_ptr.vmem [resolvable:$true] %s534
          %540 = dma.vmem_to_hbm [thread:$0]  %s535, 256, %s533, %s519, 128, 128, 8
        $region60: #{tpu_custom_call.1} parent=31 // pred_fallthru
          _
      $region32: #{tpu_custom_call.1} parent=5 // pred_fallthru
        _
      %p541 = scmp.le.s32.totalorder 2, %s14
      // Predicated region
      $region61: #{tpu_custom_call.1} parent=5 // pred_check
        %p542 = pneg %p541
      $region62: #{tpu_custom_call.1} parent=5 // pred_check_branch
        %544 = sbr.rel (%p542) target = $region64
      $region63: #{tpu_custom_call.1} parent=5 // pred_region
        %s545 = ssub.s32 %s14, 2
        // Predicated region
        $region65: #{tpu_custom_call.1} parent=63 // pred_check
          %p546 = pneg %p144
        $region66: #{tpu_custom_call.1} parent=63 // pred_check_branch
          %548 = sbr.rel (%p546) target = $region68
        $region67: #{tpu_custom_call.1} parent=63 // pred_region
          %s549 = sand.u32 %s129, 1
          %s550 = scalar_lea.sflag [#allocation6], %s549
          %s551 = sand.u32 %s129, 1
          %s552 = smul.addr %s551, 16
          %s553 = scalar_lea.vmem [#allocation9], %s552
          %554 = dma.done %s550, 256
        $region68: #{tpu_custom_call.1} parent=63 // pred_fallthru
          _
      $region64: #{tpu_custom_call.1} parent=5 // pred_fallthru
        _
    $region6: #{tpu_custom_call.1} parent=1 // loop_footer
      %s18 = sadd.s32 1, %s14
    $region7: #{tpu_custom_call.1} parent=1 // loop_footer_branch
      %13 = sbr.rel target = $region3
    $region8: #{tpu_custom_call.1} parent=1 // loop_exit
      _
    %555 = vsyncpa [#allocation5], 1
    %s556 = scalar_lea.sflag [#allocation5], 1
    %557 = vsyncpa %s556, 1
    %558 = vsyncpa [#allocation8], 1
    %559 = vsyncpa [#allocation6], 1
    %s560 = scalar_lea.sflag [#allocation6], 1
    %561 = vsyncpa %s560, 1

</llo_original>
